<compile_context>
chip_gen: v7x
topology: tpu7x:2x2x1
jax: 0.10.0
libtpu: 0.0.40
codegen_flags: <defaults>
</compile_context>

<pallas_src>
import functools

import jax
import jax.numpy as jnp
from jax.experimental import pallas as pl
from jax.experimental.pallas import tpu as pltpu


def _round_up(x, m):
    return (x + m - 1) // m * m


def _cdiv(a, b):
    return (a + b - 1) // b


# --------------------- pass 1: conv + activation + per-tile partial stats ---------------------

def _conv_act_stats_kernel(x_ref, w_ref, y_ref, sum_ref, sq_ref, *,
                           K, stride, TL, L_out, n_L1, use_relu, use_mxu):
    """One (batch row, L tile) step: K-tap conv accumulation + activation, bf16 lane-dense
    output tile, plus this tile's per-channel sum / sum-of-squares (masked on the last tile)."""
    lt = pl.program_id(1)
    C_out = y_ref.shape[0]
    C_in = x_ref.shape[1]

    w = w_ref[...]                                      # (K, C_out, C_in) f32, loaded once
    acc = jnp.zeros((C_out, TL), jnp.float32)
    if use_mxu:
        w_bf = w.astype(jnp.bfloat16)                   # tiny one-off cast, hoisted
        for k in range(K):                              # K small & static -> unrolled
            p, q = k % stride, k // stride
            xs = x_ref[p, :, q:q + TL]                  # (C_in, TL) bf16, static slice
            acc += jnp.dot(w_bf[k], xs, preferred_element_type=jnp.float32)
    else:
        # Tiny C_in*K and short rows: K*C_in rank-1 VPU MACs with hoisted f32 weights.
        for k in range(K):
            p, q = k % stride, k // stride
            xs = x_ref[p, :, q:q + TL].astype(jnp.float32)
            for ci in range(C_in):
                acc += w[k, :, ci:ci + 1] * xs[ci:ci + 1, :]

    if use_relu:
        acc = jnp.maximum(acc, 0.0)
    y_ref[...] = acc.astype(y_ref.dtype)                # bf16 intermediate (stats use f32 acc)

    def _stats(vals):
        sum_ref[...] = jnp.sum(vals, axis=1, keepdims=True)
        sq_ref[...] = jnp.sum(vals * vals, axis=1, keepdims=True)

    if L_out == TL * n_L1:
        _stats(acc)                                     # no padded lanes anywhere
    else:
        last = n_L1 - 1
        tail = L_out - last * TL                        # valid lanes in last tile (static int)

        @pl.when(lt != last)
        def _():
            _stats(acc)

        @pl.when(lt == last)
        def _():
            lane = jax.lax.broadcasted_iota(jnp.int32, acc.shape, 1)
            _stats(jnp.where(lane < tail, acc, 0.0))


# ------------------------------------ pass 2: normalize ---------------------------------------

def _bn_apply_kernel(y_ref, scale_ref, shift_ref, out_ref):
    y = y_ref[...].astype(jnp.float32)                  # (NB, C_out, TL)
    # (C_out, 1) scale/shift broadcast over batch-block and lane axes.
    out_ref[...] = (y * scale_ref[...] + shift_ref[...]).astype(out_ref.dtype)


def batchnorm_conv1d(x, weight, gamma, beta, *, stride, padding,
                     eps=1e-5, use_relu=True):
    """
    x:      (N, C_in, L)      float32  (PyTorch NCL layout)
    weight: (C_out, C_in, K)  float32  (Conv1d weight, bias=False)
    gamma:  (C_out,)          float32  (BatchNorm1d weight)
    beta:   (C_out,)          float32  (BatchNorm1d bias)
    returns (N, C_out, L_out) float32, NCL layout: conv -> activation -> training-mode BN.
    """
    N, C_in, L = x.shape
    C_out, _, K = weight.shape
    L_out = (L + 2 * padding - K) // stride + 1
    assert L_out > 0 and N > 0

    # ---- L tiling: lane axis = L_out; tile sized against a ~24 MiB pass-1 VMEM budget ----
    per_col = 4 * stride * C_in + 8 * C_out             # bytes/output column (dbl-buf x,y + f32 acc)
    cap = max(128, min(32768, ((24 << 20) // per_col) // 128 * 128))
    L128 = _round_up(L_out, 128)
    n_L1 = _cdiv(L128, cap)                             # number of L tiles
    TL = _round_up(_cdiv(L128, n_L1), 128)              # lane tile (multiple of 128, <= cap)
    L_out_pad = TL * n_L1

    q_max = (K - 1) // stride
    assert q_max <= 128, "kernel tap span exceeds one 128-lane halo"
    HALO = 128 if q_max > 0 else 0
    TL_in = TL + HALO
    L_phase = L_out_pad + HALO
    L_full = L_phase * stride

    # ---- input prep: single pad (+trim) -> bf16 -> phase split -> halo'd L tiles ----
    # stride==1: phase transpose is degenerate; n_L1==1: window stack is a pure expand_dims,
    # so the common case is one fused pad+cast pass over x.  (stride>1 transpose is a copy.)
    right = L_full - L - padding
    if right >= 0:
        x_pad = jnp.pad(x, ((0, 0), (0, 0), (padding, right)))
    else:
        x_pad = jnp.pad(x, ((0, 0), (0, 0), (padding, 0)))[:, :, :L_full]   # tail never read
    x_pad = x_pad.astype(jnp.bfloat16)
    # x_ph[p, n, c, l'] = x_pad[n, c, l'*stride + p]
    x_ph = x_pad.reshape(N, C_in, L_phase, stride).transpose(3, 0, 1, 2)
    # x_tiles[p, n, lt, c, j] = x_ph[p, n, c, lt*TL + j]  (halo duplication ~HALO/TL of bytes)
    x_tiles = jnp.stack([x_ph[..., lt * TL: lt * TL + TL_in] for lt in range(n_L1)], axis=2)

    # Weight stays f32: only K*C_out*C_in elements, better numerics, zero bandwidth cost.
    w_f32 = jnp.transpose(weight, (2, 0, 1)).astype(jnp.float32)     # (K, C_out, C_in)

    use_mxu = (C_in * K > 32) or (TL >= 512)

    # ---- VMEM limits (cap 48 MiB: safe under v7x's 64 MiB physical, raises v5e default) ----
    x_blk = stride * C_in * TL_in * 2
    y_blk = C_out * TL * 2
    w_blk = K * C_out * C_in * 4
    est1 = 2 * x_blk + 2 * y_blk + 4 * w_blk + C_out * TL * 4 + (2 << 20)
    vmem1 = int(min(48 << 20, max(24 << 20, est1)))

    # ---- pass 1: conv + activation + per-(n, L-tile) partial stats (fully parallel grid) ----
    kernel1 = functools.partial(_conv_act_stats_kernel, K=K, stride=stride, TL=TL,
                                L_out=L_out, n_L1=n_L1, use_relu=use_relu, use_mxu=use_mxu)
    y, ps, psq = pl.pallas_call(
        kernel1,
        out_shape=(
            jax.ShapeDtypeStruct((N, C_out, L_out_pad), jnp.bfloat16),
            jax.ShapeDtypeStruct((N, n_L1, C_out, 1), jnp.float32),
            jax.ShapeDtypeStruct((N, n_L1, C_out, 1), jnp.float32),
        ),
        grid=(N, n_L1),
        in_specs=[
            pl.BlockSpec((stride, None, None, C_in, TL_in), lambda n, lt: (0, n, lt, 0, 0)),
            pl.BlockSpec((K, C_out, C_in), lambda n, lt: (0, 0, 0)),
        ],
        out_specs=(
            pl.BlockSpec((None, C_out, TL), lambda n, lt: (n, 0, lt)),
            pl.BlockSpec((None, None, C_out, 1), lambda n, lt: (n, lt, 0, 0)),
            pl.BlockSpec((None, None, C_out, 1), lambda n, lt: (n, lt, 0, 0)),
        ),
        compiler_params=pltpu.CompilerParams(
            dimension_semantics=("parallel", "parallel"),   # megacore sharding on v7x
            vmem_limit_bytes=vmem1),
    )(x_tiles, w_f32)

    # ---- finalize batch stats (tiny (C_out,) math; biased variance = PyTorch training mode) ----
    # TODO(synk): one-pass E[x^2]-E[x]^2 in f32 can cancel for extreme N*L_out; a compensated
    # or mean-shifted reduction would be needed at that scale.
    cnt = float(N * L_out)
    mean = ps.sum(axis=(0, 1)) / cnt                     # (C_out, 1)
    var = jnp.maximum(psq.sum(axis=(0, 1)) / cnt - mean * mean, 0.0)
    inv_std = jax.lax.rsqrt(var + jnp.float32(eps))
    scale = gamma.reshape(C_out, 1).astype(jnp.float32) * inv_std
    shift = beta.reshape(C_out, 1).astype(jnp.float32) - mean * scale

    # ---- pass 2: y * scale + shift over MiB-class (NB, C_out, TL) blocks ----
    nb_want = max(1, (4 << 20) // (C_out * TL * 6))      # ~4 MiB of y+out per grid step
    NB = 1
    for d in range(min(N, nb_want), 0, -1):
        if N % d == 0:
            NB = d
            break
    est2 = 2 * (NB * C_out * TL * 2 + NB * C_out * TL * 4) + (2 << 20)
    vmem2 = int(min(48 << 20, max(24 << 20, est2)))

    out = pl.pallas_call(
        _bn_apply_kernel,
        out_shape=jax.ShapeDtypeStruct((N, C_out, L_out_pad), jnp.float32),
        grid=(N // NB, n_L1),
        in_specs=[
            pl.BlockSpec((NB, C_out, TL), lambda nb, lt: (nb, 0, lt)),
            pl.BlockSpec((C_out, 1), lambda nb, lt: (0, 0)),
            pl.BlockSpec((C_out, 1), lambda nb, lt: (0, 0)),
        ],
        out_specs=pl.BlockSpec((NB, C_out, TL), lambda nb, lt: (nb, 0, lt)),
        compiler_params=pltpu.CompilerParams(
            dimension_semantics=("parallel", "parallel"),
            vmem_limit_bytes=vmem2),
    )(y, scale, shift)

    # Output is already NCL; drop lane padding only when present (no-op when aligned).
    return out if L_out == L_out_pad else out[:, :, :L_out]


if __name__ == "__main__":
    # Module config: BatchNormConv1d(in_channels=4, out_channels=8, kernel_size=3,
    #                                stride=1, padding=1, activation=ReLU)
    N, C_in, L = 2, 4, 16
    C_out, K, stride, padding = 8, 3, 1, 1

    key = jax.random.PRNGKey(0)
    kx, kw = jax.random.split(key)
    x = jax.random.normal(kx, (N, C_in, L), dtype=jnp.float32)
    weight = 0.1 * jax.random.normal(kw, (C_out, C_in, K), dtype=jnp.float32)
    gamma = jnp.ones((C_out,), dtype=jnp.float32)    # BatchNorm1d default init
    beta = jnp.zeros((C_out,), dtype=jnp.float32)

    out = batchnorm_conv1d(x, weight, gamma, beta,
                           stride=stride, padding=padding, use_relu=True)
    out = jax.block_until_ready(out)
    assert out.shape == (N, C_out, L)

    # Pure-JAX reference (f32 conv -> ReLU -> training-mode BN); tolerance absorbs the
    # bf16 x stream and bf16 intermediate y.
    y_ref = jax.lax.conv_general_dilated(
        x, weight, window_strides=(stride,), padding=[(padding, padding)],
        dimension_numbers=("NCH", "OIH", "NCH"))
    y_ref = jnp.maximum(y_ref, 0.0)
    mean = y_ref.mean(axis=(0, 2), keepdims=True)
    var = ((y_ref - mean) ** 2).mean(axis=(0, 2), keepdims=True)
    ref = ((y_ref - mean) * jax.lax.rsqrt(var + 1e-5)
           * gamma.reshape(1, -1, 1) + beta.reshape(1, -1, 1))
    err = float(jnp.max(jnp.abs(out - ref)))
    assert err < 5e-2, f"max abs err {err}"
    print("KERNEL_OK")
</pallas_src>

<mosaic_0001>
module attributes {stable_mosaic.version = 11 : i64} {
  func.func @_conv_act_stats_kernel(%arg0: i32, %arg1: i32, %arg2: memref<1x1x1x4x256xbf16, #tpu.memory_space<vmem>>, %arg3: memref<3x8x4xf32, #tpu.memory_space<vmem>>, %arg4: memref<1x8x128xbf16, #tpu.memory_space<vmem>>, %arg5: memref<1x1x8x1xf32, #tpu.memory_space<vmem>>, %arg6: memref<1x1x8x1xf32, #tpu.memory_space<vmem>>) attributes {dimension_semantics = [#tpu.dimension_semantics<parallel>, #tpu.dimension_semantics<parallel>], iteration_bounds = array<i64: 2, 1>, scalar_prefetch = 0 : i64, scratch_operands = 0 : i64, tpu.core_type = #tpu.core_type<tc>, window_params = [{transform_indices = @transform_0, window_bounds = array<i64: 1, 1, 1, 4, 256>}, {pipeline_mode = #tpu.pipeline_mode<synchronous>, transform_indices = @transform_1, window_bounds = array<i64: 3, 8, 4>}, {transform_indices = @transform_2, window_bounds = array<i64: 1, 8, 128>}, {transform_indices = @transform_3, window_bounds = array<i64: 1, 1, 8, 1>}, {transform_indices = @transform_4, window_bounds = array<i64: 1, 1, 8, 1>}]} {
    %c0 = arith.constant 0 : index
    %c0_0 = arith.constant 0 : index
    %c0_1 = arith.constant 0 : index
    %0 = vector.load %arg3[%c0, %c0_0, %c0_1] : memref<3x8x4xf32, #tpu.memory_space<vmem>>, vector<3x8x4xf32>
    %cst = arith.constant 0.000000e+00 : f32
    %1 = vector.broadcast %cst : f32 to vector<8x128xf32>
    %c0_2 = arith.constant 0 : index
    %c0_3 = arith.constant 0 : index
    %c0_4 = arith.constant 0 : index
    %c0_5 = arith.constant 0 : index
    %c0_6 = arith.constant 0 : index
    %2 = vector.load %arg2[%c0_2, %c0_3, %c0_4, %c0_5, %c0_6] : memref<1x1x1x4x256xbf16, #tpu.memory_space<vmem>>, vector<1x1x1x4x128xbf16>
    %3 = vector.shape_cast %2 : vector<1x1x1x4x128xbf16> to vector<4x128xbf16>
    %4 = arith.extf %3 : vector<4x128xbf16> to vector<4x128xf32>
    %5 = vector.extract_strided_slice %0 {offsets = [0, 0, 0], sizes = [1, 8, 1], strides = [1, 1, 1]} : vector<3x8x4xf32> to vector<1x8x1xf32>
    %6 = vector.shape_cast %5 : vector<1x8x1xf32> to vector<8x1xf32>
    %7 = vector.extract_strided_slice %4 {offsets = [0, 0], sizes = [1, 128], strides = [1, 1]} : vector<4x128xf32> to vector<1x128xf32>
    %8 = vector.broadcast %6 : vector<8x1xf32> to vector<8x128xf32>
    %9 = vector.broadcast %7 : vector<1x128xf32> to vector<8x128xf32>
    %10 = arith.mulf %8, %9 : vector<8x128xf32>
    %11 = arith.addf %1, %10 : vector<8x128xf32>
    %12 = vector.extract_strided_slice %0 {offsets = [0, 0, 1], sizes = [1, 8, 1], strides = [1, 1, 1]} : vector<3x8x4xf32> to vector<1x8x1xf32>
    %13 = vector.shape_cast %12 : vector<1x8x1xf32> to vector<8x1xf32>
    %14 = vector.extract_strided_slice %4 {offsets = [1, 0], sizes = [1, 128], strides = [1, 1]} : vector<4x128xf32> to vector<1x128xf32>
    %15 = vector.broadcast %13 : vector<8x1xf32> to vector<8x128xf32>
    %16 = vector.broadcast %14 : vector<1x128xf32> to vector<8x128xf32>
    %17 = arith.mulf %15, %16 : vector<8x128xf32>
    %18 = arith.addf %11, %17 : vector<8x128xf32>
    %19 = vector.extract_strided_slice %0 {offsets = [0, 0, 2], sizes = [1, 8, 1], strides = [1, 1, 1]} : vector<3x8x4xf32> to vector<1x8x1xf32>
    %20 = vector.shape_cast %19 : vector<1x8x1xf32> to vector<8x1xf32>
    %21 = vector.extract_strided_slice %4 {offsets = [2, 0], sizes = [1, 128], strides = [1, 1]} : vector<4x128xf32> to vector<1x128xf32>
    %22 = vector.broadcast %20 : vector<8x1xf32> to vector<8x128xf32>
    %23 = vector.broadcast %21 : vector<1x128xf32> to vector<8x128xf32>
    %24 = arith.mulf %22, %23 : vector<8x128xf32>
    %25 = arith.addf %18, %24 : vector<8x128xf32>
    %26 = vector.extract_strided_slice %0 {offsets = [0, 0, 3], sizes = [1, 8, 1], strides = [1, 1, 1]} : vector<3x8x4xf32> to vector<1x8x1xf32>
    %27 = vector.shape_cast %26 : vector<1x8x1xf32> to vector<8x1xf32>
    %28 = vector.extract_strided_slice %4 {offsets = [3, 0], sizes = [1, 128], strides = [1, 1]} : vector<4x128xf32> to vector<1x128xf32>
    %29 = vector.broadcast %27 : vector<8x1xf32> to vector<8x128xf32>
    %30 = vector.broadcast %28 : vector<1x128xf32> to vector<8x128xf32>
    %31 = arith.mulf %29, %30 : vector<8x128xf32>
    %32 = arith.addf %25, %31 : vector<8x128xf32>
    %c0_7 = arith.constant 0 : index
    %c0_8 = arith.constant 0 : index
    %c0_9 = arith.constant 0 : index
    %c0_10 = arith.constant 0 : index
    %c1 = arith.constant 1 : index
    %33 = vector.load %arg2[%c0_7, %c0_8, %c0_9, %c0_10, %c1] : memref<1x1x1x4x256xbf16, #tpu.memory_space<vmem>>, vector<1x1x1x4x128xbf16>
    %34 = vector.shape_cast %33 : vector<1x1x1x4x128xbf16> to vector<4x128xbf16>
    %35 = arith.extf %34 : vector<4x128xbf16> to vector<4x128xf32>
    %36 = vector.extract_strided_slice %0 {offsets = [1, 0, 0], sizes = [1, 8, 1], strides = [1, 1, 1]} : vector<3x8x4xf32> to vector<1x8x1xf32>
    %37 = vector.shape_cast %36 : vector<1x8x1xf32> to vector<8x1xf32>
    %38 = vector.extract_strided_slice %35 {offsets = [0, 0], sizes = [1, 128], strides = [1, 1]} : vector<4x128xf32> to vector<1x128xf32>
    %39 = vector.broadcast %37 : vector<8x1xf32> to vector<8x128xf32>
    %40 = vector.broadcast %38 : vector<1x128xf32> to vector<8x128xf32>
    %41 = arith.mulf %39, %40 : vector<8x128xf32>
    %42 = arith.addf %32, %41 : vector<8x128xf32>
    %43 = vector.extract_strided_slice %0 {offsets = [1, 0, 1], sizes = [1, 8, 1], strides = [1, 1, 1]} : vector<3x8x4xf32> to vector<1x8x1xf32>
    %44 = vector.shape_cast %43 : vector<1x8x1xf32> to vector<8x1xf32>
    %45 = vector.extract_strided_slice %35 {offsets = [1, 0], sizes = [1, 128], strides = [1, 1]} : vector<4x128xf32> to vector<1x128xf32>
    %46 = vector.broadcast %44 : vector<8x1xf32> to vector<8x128xf32>
    %47 = vector.broadcast %45 : vector<1x128xf32> to vector<8x128xf32>
    %48 = arith.mulf %46, %47 : vector<8x128xf32>
    %49 = arith.addf %42, %48 : vector<8x128xf32>
    %50 = vector.extract_strided_slice %0 {offsets = [1, 0, 2], sizes = [1, 8, 1], strides = [1, 1, 1]} : vector<3x8x4xf32> to vector<1x8x1xf32>
    %51 = vector.shape_cast %50 : vector<1x8x1xf32> to vector<8x1xf32>
    %52 = vector.extract_strided_slice %35 {offsets = [2, 0], sizes = [1, 128], strides = [1, 1]} : vector<4x128xf32> to vector<1x128xf32>
    %53 = vector.broadcast %51 : vector<8x1xf32> to vector<8x128xf32>
    %54 = vector.broadcast %52 : vector<1x128xf32> to vector<8x128xf32>
    %55 = arith.mulf %53, %54 : vector<8x128xf32>
    %56 = arith.addf %49, %55 : vector<8x128xf32>
    %57 = vector.extract_strided_slice %0 {offsets = [1, 0, 3], sizes = [1, 8, 1], strides = [1, 1, 1]} : vector<3x8x4xf32> to vector<1x8x1xf32>
    %58 = vector.shape_cast %57 : vector<1x8x1xf32> to vector<8x1xf32>
    %59 = vector.extract_strided_slice %35 {offsets = [3, 0], sizes = [1, 128], strides = [1, 1]} : vector<4x128xf32> to vector<1x128xf32>
    %60 = vector.broadcast %58 : vector<8x1xf32> to vector<8x128xf32>
    %61 = vector.broadcast %59 : vector<1x128xf32> to vector<8x128xf32>
    %62 = arith.mulf %60, %61 : vector<8x128xf32>
    %63 = arith.addf %56, %62 : vector<8x128xf32>
    %c0_11 = arith.constant 0 : index
    %c0_12 = arith.constant 0 : index
    %c0_13 = arith.constant 0 : index
    %c0_14 = arith.constant 0 : index
    %c2 = arith.constant 2 : index
    %64 = vector.load %arg2[%c0_11, %c0_12, %c0_13, %c0_14, %c2] : memref<1x1x1x4x256xbf16, #tpu.memory_space<vmem>>, vector<1x1x1x4x128xbf16>
    %65 = vector.shape_cast %64 : vector<1x1x1x4x128xbf16> to vector<4x128xbf16>
    %66 = arith.extf %65 : vector<4x128xbf16> to vector<4x128xf32>
    %67 = vector.extract_strided_slice %0 {offsets = [2, 0, 0], sizes = [1, 8, 1], strides = [1, 1, 1]} : vector<3x8x4xf32> to vector<1x8x1xf32>
    %68 = vector.shape_cast %67 : vector<1x8x1xf32> to vector<8x1xf32>
    %69 = vector.extract_strided_slice %66 {offsets = [0, 0], sizes = [1, 128], strides = [1, 1]} : vector<4x128xf32> to vector<1x128xf32>
    %70 = vector.broadcast %68 : vector<8x1xf32> to vector<8x128xf32>
    %71 = vector.broadcast %69 : vector<1x128xf32> to vector<8x128xf32>
    %72 = arith.mulf %70, %71 : vector<8x128xf32>
    %73 = arith.addf %63, %72 : vector<8x128xf32>
    %74 = vector.extract_strided_slice %0 {offsets = [2, 0, 1], sizes = [1, 8, 1], strides = [1, 1, 1]} : vector<3x8x4xf32> to vector<1x8x1xf32>
    %75 = vector.shape_cast %74 : vector<1x8x1xf32> to vector<8x1xf32>
    %76 = vector.extract_strided_slice %66 {offsets = [1, 0], sizes = [1, 128], strides = [1, 1]} : vector<4x128xf32> to vector<1x128xf32>
    %77 = vector.broadcast %75 : vector<8x1xf32> to vector<8x128xf32>
    %78 = vector.broadcast %76 : vector<1x128xf32> to vector<8x128xf32>
    %79 = arith.mulf %77, %78 : vector<8x128xf32>
    %80 = arith.addf %73, %79 : vector<8x128xf32>
    %81 = vector.extract_strided_slice %0 {offsets = [2, 0, 2], sizes = [1, 8, 1], strides = [1, 1, 1]} : vector<3x8x4xf32> to vector<1x8x1xf32>
    %82 = vector.shape_cast %81 : vector<1x8x1xf32> to vector<8x1xf32>
    %83 = vector.extract_strided_slice %66 {offsets = [2, 0], sizes = [1, 128], strides = [1, 1]} : vector<4x128xf32> to vector<1x128xf32>
    %84 = vector.broadcast %82 : vector<8x1xf32> to vector<8x128xf32>
    %85 = vector.broadcast %83 : vector<1x128xf32> to vector<8x128xf32>
    %86 = arith.mulf %84, %85 : vector<8x128xf32>
    %87 = arith.addf %80, %86 : vector<8x128xf32>
    %88 = vector.extract_strided_slice %0 {offsets = [2, 0, 3], sizes = [1, 8, 1], strides = [1, 1, 1]} : vector<3x8x4xf32> to vector<1x8x1xf32>
    %89 = vector.shape_cast %88 : vector<1x8x1xf32> to vector<8x1xf32>
    %90 = vector.extract_strided_slice %66 {offsets = [3, 0], sizes = [1, 128], strides = [1, 1]} : vector<4x128xf32> to vector<1x128xf32>
    %91 = vector.broadcast %89 : vector<8x1xf32> to vector<8x128xf32>
    %92 = vector.broadcast %90 : vector<1x128xf32> to vector<8x128xf32>
    %93 = arith.mulf %91, %92 : vector<8x128xf32>
    %94 = arith.addf %87, %93 : vector<8x128xf32>
    %cst_15 = arith.constant 0.000000e+00 : f32
    %95 = vector.broadcast %cst_15 : f32 to vector<8x128xf32>
    %96 = arith.maximumf %94, %95 : vector<8x128xf32>
    %97 = arith.truncf %96 : vector<8x128xf32> to vector<8x128xbf16>
    %c0_16 = arith.constant 0 : index
    %c0_17 = arith.constant 0 : index
    %c0_18 = arith.constant 0 : index
    %98 = vector.load %arg4[%c0_16, %c0_17, %c0_18] : memref<1x8x128xbf16, #tpu.memory_space<vmem>>, vector<1x8x128xbf16>
    %99 = vector.shape_cast %98 : vector<1x8x128xbf16> to vector<8x128xbf16>
    %100 = vector.shape_cast %97 : vector<8x128xbf16> to vector<1x8x128xbf16>
    tpu.vector_store %arg4[%c0_16, %c0_17, %c0_18], %100 {strides = array<i32>} : memref<1x8x128xbf16, #tpu.memory_space<vmem>>, vector<1x8x128xbf16>,
    %c0_i32 = arith.constant 0 : i32
    %101 = arith.cmpi ne, %arg1, %c0_i32 : i32
    %102 = arith.extui %101 : i1 to i32
    %c0_i32_19 = arith.constant 0 : i32
    %103 = arith.cmpi ne, %102, %c0_i32_19 : i32
    scf.if %103 {
      %cst_22 = arith.constant dense<0.000000e+00> : vector<8xf32>
      %107 = vector.multi_reduction <add>, %96, %cst_22 [1] : vector<8x128xf32> to vector<8xf32>
      %108 = vector.shape_cast %107 : vector<8xf32> to vector<8x1xf32>
      %c0_23 = arith.constant 0 : index
      %c0_24 = arith.constant 0 : index
      %c0_25 = arith.constant 0 : index
      %c0_26 = arith.constant 0 : index
      %109 = vector.load %arg5[%c0_23, %c0_24, %c0_25, %c0_26] : memref<1x1x8x1xf32, #tpu.memory_space<vmem>>, vector<1x1x8x1xf32>
      %110 = vector.shape_cast %109 : vector<1x1x8x1xf32> to vector<8x1xf32>
      %111 = vector.shape_cast %108 : vector<8x1xf32> to vector<1x1x8x1xf32>
      tpu.vector_store %arg5[%c0_23, %c0_24, %c0_25, %c0_26], %111 {strides = array<i32>} : memref<1x1x8x1xf32, #tpu.memory_space<vmem>>, vector<1x1x8x1xf32>,
      %112 = arith.mulf %96, %96 : vector<8x128xf32>
      %cst_27 = arith.constant dense<0.000000e+00> : vector<8xf32>
      %113 = vector.multi_reduction <add>, %112, %cst_27 [1] : vector<8x128xf32> to vector<8xf32>
      %114 = vector.shape_cast %113 : vector<8xf32> to vector<8x1xf32>
      %c0_28 = arith.constant 0 : index
      %c0_29 = arith.constant 0 : index
      %c0_30 = arith.constant 0 : index
      %c0_31 = arith.constant 0 : index
      %115 = vector.load %arg6[%c0_28, %c0_29, %c0_30, %c0_31] : memref<1x1x8x1xf32, #tpu.memory_space<vmem>>, vector<1x1x8x1xf32>
      %116 = vector.shape_cast %115 : vector<1x1x8x1xf32> to vector<8x1xf32>
      %117 = vector.shape_cast %114 : vector<8x1xf32> to vector<1x1x8x1xf32>
      tpu.vector_store %arg6[%c0_28, %c0_29, %c0_30, %c0_31], %117 {strides = array<i32>} : memref<1x1x8x1xf32, #tpu.memory_space<vmem>>, vector<1x1x8x1xf32>,
    } else {
    }
    %c0_i32_20 = arith.constant 0 : i32
    %104 = arith.cmpi eq, %arg1, %c0_i32_20 : i32
    %105 = arith.extui %104 : i1 to i32
    %c0_i32_21 = arith.constant 0 : i32
    %106 = arith.cmpi ne, %105, %c0_i32_21 : i32
    scf.if %106 {
      %107 = tpu.iota {dimensions = array<i32: 1>} : vector<8x128xi32>
      %c16_i32 = arith.constant 16 : i32
      %108 = vector.broadcast %c16_i32 : i32 to vector<8x128xi32>
      %109 = arith.cmpi slt, %107, %108 : vector<8x128xi32>
      %cst_22 = arith.constant 0.000000e+00 : f32
      %110 = vector.broadcast %cst_22 : f32 to vector<8x128xf32>
      %111 = arith.select %109, %96, %110 : vector<8x128xi1>, vector<8x128xf32>
      %cst_23 = arith.constant dense<0.000000e+00> : vector<8xf32>
      %112 = vector.multi_reduction <add>, %111, %cst_23 [1] : vector<8x128xf32> to vector<8xf32>
      %113 = vector.shape_cast %112 : vector<8xf32> to vector<8x1xf32>
      %c0_24 = arith.constant 0 : index
      %c0_25 = arith.constant 0 : index
      %c0_26 = arith.constant 0 : index
      %c0_27 = arith.constant 0 : index
      %114 = vector.load %arg5[%c0_24, %c0_25, %c0_26, %c0_27] : memref<1x1x8x1xf32, #tpu.memory_space<vmem>>, vector<1x1x8x1xf32>
      %115 = vector.shape_cast %114 : vector<1x1x8x1xf32> to vector<8x1xf32>
      %116 = vector.shape_cast %113 : vector<8x1xf32> to vector<1x1x8x1xf32>
      tpu.vector_store %arg5[%c0_24, %c0_25, %c0_26, %c0_27], %116 {strides = array<i32>} : memref<1x1x8x1xf32, #tpu.memory_space<vmem>>, vector<1x1x8x1xf32>,
      %117 = arith.mulf %111, %111 : vector<8x128xf32>
      %cst_28 = arith.constant dense<0.000000e+00> : vector<8xf32>
      %118 = vector.multi_reduction <add>, %117, %cst_28 [1] : vector<8x128xf32> to vector<8xf32>
      %119 = vector.shape_cast %118 : vector<8xf32> to vector<8x1xf32>
      %c0_29 = arith.constant 0 : index
      %c0_30 = arith.constant 0 : index
      %c0_31 = arith.constant 0 : index
      %c0_32 = arith.constant 0 : index
      %120 = vector.load %arg6[%c0_29, %c0_30, %c0_31, %c0_32] : memref<1x1x8x1xf32, #tpu.memory_space<vmem>>, vector<1x1x8x1xf32>
      %121 = vector.shape_cast %120 : vector<1x1x8x1xf32> to vector<8x1xf32>
      %122 = vector.shape_cast %119 : vector<8x1xf32> to vector<1x1x8x1xf32>
      tpu.vector_store %arg6[%c0_29, %c0_30, %c0_31, %c0_32], %122 {strides = array<i32>} : memref<1x1x8x1xf32, #tpu.memory_space<vmem>>, vector<1x1x8x1xf32>,
    } else {
    }
    return
  }
  func.func @transform_0(%arg0: i32, %arg1: i32) -> (i32, i32, i32, i32, i32) {
    %c0_i32 = arith.constant 0 : i32
    %c0_i32_0 = arith.constant 0 : i32
    %c0_i32_1 = arith.constant 0 : i32
    %c0_i32_2 = arith.constant 0 : i32
    return %c0_i32, %arg0, %arg1, %c0_i32_0, %c0_i32_1 : i32, i32, i32, i32, i32
  }
  func.func @transform_1(%arg0: i32, %arg1: i32) -> (i32, i32, i32) {
    %c0_i32 = arith.constant 0 : i32
    %c0_i32_0 = arith.constant 0 : i32
    %c0_i32_1 = arith.constant 0 : i32
    %c0_i32_2 = arith.constant 0 : i32
    return %c0_i32, %c0_i32_0, %c0_i32_1 : i32, i32, i32
  }
  func.func @transform_2(%arg0: i32, %arg1: i32) -> (i32, i32, i32) {
    %c0_i32 = arith.constant 0 : i32
    %c0_i32_0 = arith.constant 0 : i32
    return %arg0, %c0_i32, %arg1 : i32, i32, i32
  }
  func.func @transform_3(%arg0: i32, %arg1: i32) -> (i32, i32, i32, i32) {
    %c0_i32 = arith.constant 0 : i32
    %c0_i32_0 = arith.constant 0 : i32
    %c0_i32_1 = arith.constant 0 : i32
    return %arg0, %arg1, %c0_i32, %c0_i32_0 : i32, i32, i32, i32
  }
  func.func @transform_4(%arg0: i32, %arg1: i32) -> (i32, i32, i32, i32) {
    %c0_i32 = arith.constant 0 : i32
    %c0_i32_0 = arith.constant 0 : i32
    %c0_i32_1 = arith.constant 0 : i32
    return %arg0, %arg1, %c0_i32, %c0_i32_0 : i32, i32, i32, i32
  }
}

</mosaic_0001>

<llo_original>
// kernel: tpu_custom_call.1
$region0: #{tpu_custom_call.1}
  #allocation0 [shape = 'u32[]', space=smem, size = 0x4, offset = 0x4, fixed_abs, tag = 'smem constant byte address 0x4 - core index']
  #allocation1 [shape = 'u32[144,128]{1,0:T(1,128)}', space=vmem, size = 0x12000, scoped, tag = 'internal scratch']
  %s0 = inlined_call_operand.vmem [shape: bf16[1,2,1,4,256], index: 0, kind: input, shape index: {}]
  %s1 = inlined_call_operand.vmem [shape: f32[3,8,4], index: 1, kind: input, shape index: {}]
  %s2 = inlined_call_operand.hbm [shape: bf16[2,8,128], index: 2, kind: output, shape index: {0}]
  %s3 = inlined_call_operand.vmem [shape: f32[2,1,8,1], index: 3, kind: output, shape index: {1}]
  %s4 = inlined_call_operand.vmem [shape: f32[2,1,8,1], index: 4, kind: output, shape index: {2}]
  %5 = xla_tuple %s2, %s3, %s4
  %s6 = sld [smem:[#allocation0]]
  $region65: #{tpu_custom_call.1} parent=0
    _
  %s8 = ssub.s32 1, %s6
  %s9 = scalar_select 0, %s8, %s6
  $region1: #{tpu_custom_call.1} parent=0
    #allocation2 [shape = 'u8[4096]{0}', space=vmem, size = 0x1000, scoped, tag = 'output window, operand 0']
    #allocation3 [shape = 's32[2]{0}', space=sflag, size = 0x8, scoped, tag = 'scoped memory for tpu_custom_call.1']
    %10 = vsyncpa [#allocation3], 0
    %s11 = scalar_lea.sflag [#allocation3], 1
    %12 = vsyncpa %s11, 0
    loop: start=0, step=1, limit=4
    $region2: #{tpu_custom_call.1} parent=1 // loop_pre_header
      _
    $region3: #{tpu_custom_call.1} parent=1 // loop_header
      %s14 = sphi 0, %s18
      %p15 = scmp.ge.s32.totalorder %s14, 4
      %s21 = sphi 0, %s33
      %s22 = sphi 0, %s29
      %s23 = sphi 0, %s21
      %s24 = sphi 0, %s22
      %s25 = sphi 0, %s23
      %s26 = sphi 0, %s24
      %s38 = sphi 0, %s40
      %s41 = sphi 0, %s38
      %s42 = sphi 0, %s41
      %s58 = sphi 0, %s42
      %s62 = sphi 0, %s62
      %s64 = sphi 0, %s62
      %s65 = sphi 0, %s64
      %s79 = sphi 0, %s65
      %s87 = sphi 0, %s89
      %s90 = sphi 0, %s87
      %s91 = sphi 0, %s90
      %s107 = sphi 0, %s91
      %s115 = sphi 0, %s117
      %s118 = sphi 0, %s115
      %s119 = sphi 0, %s118
      %s135 = sphi 0, %s119
      %s143 = sphi 0, %s145
      %s146 = sphi 0, %s143
      %s147 = sphi 0, %s146
      %s163 = sphi 0, %s147
    $region4: #{tpu_custom_call.1} parent=1 // loop_header_branch
      %17 = sbr.rel (%p15) target = $region8
    $region5: #{tpu_custom_call.1} parent=1 // loop_body
      %s19 = ssub.s32 %s14, 1
      %s20 = ssub.s32 %s14, 2
      %s27 = sadd.s32 1, %s22
      %p28 = scmp.ge.s32.totalorder %s27, 1
      %s29 = scalar_select %p28, 0, %s27
      %s30 = sadd.s32 1, %s21
      %s31 = scalar_select %p28, %s30, %s21
      %p32 = scmp.ge.s32.totalorder %s31, 2
      %s33 = scalar_select %p32, 0, %s31
      %s34 = ssub.s32 %s21, %s33
      %s35 = ssub.s32 %s22, %s29
      %s36 = sor.u32 %s34, %s35
      %p37 = scmp.eq.s32.totalorder %s36, 0
      %s39 = sadd.s32 %s38, 1
      %s40 = scalar_select %p37, %s38, %s39
      %p43 = pneg %p37
      %p44 = scmp.eq.s32.totalorder %s14, 1
      %p45 = por %p43, %p44
      %p46 = scmp.ne.s32.totalorder %s38, %s41
      %p47 = scmp.eq.s32.totalorder %s14, 0
      %p48 = por %p46, %p47
      %p49 = scmp.ne.s32.totalorder %s38, %s41
      %p50 = scmp.eq.s32.totalorder %s19, 1
      %p51 = por %p49, %p50
      %p52 = scmp.ne.s32.totalorder %s41, %s42
      %p53 = scmp.eq.s32.totalorder %s19, 0
      %p54 = por %p52, %p53
      %p55 = scmp.ne.s32.totalorder %s41, %s42
      %p56 = scmp.eq.s32.totalorder %s20, 1
      %p57 = por %p55, %p56
      %p59 = scmp.ne.s32.totalorder %s42, %s58
      %p60 = scmp.eq.s32.totalorder %s20, 0
      %p61 = por %p59, %p60
      %s63 = sadd.s32 %s62, 1
      %p66 = scmp.eq.s32.totalorder %s14, 1
      %p67 = scmp.ne.s32.totalorder %s62, %s64
      %p68 = scmp.eq.s32.totalorder %s14, 0
      %p69 = por %p67, %p68
      %p70 = scmp.ne.s32.totalorder %s62, %s64
      %p71 = scmp.eq.s32.totalorder %s19, 1
      %p72 = por %p70, %p71
      %p73 = scmp.ne.s32.totalorder %s64, %s65
      %p74 = scmp.eq.s32.totalorder %s19, 0
      %p75 = por %p73, %p74
      %p76 = scmp.ne.s32.totalorder %s64, %s65
      %p77 = scmp.eq.s32.totalorder %s20, 1
      %p78 = por %p76, %p77
      %p80 = scmp.ne.s32.totalorder %s65, %s79
      %p81 = scmp.eq.s32.totalorder %s20, 0
      %p82 = por %p80, %p81
      %s83 = ssub.s32 %s21, %s33
      %s84 = ssub.s32 %s22, %s29
      %s85 = sor.u32 %s83, %s84
      %p86 = scmp.eq.s32.totalorder %s85, 0
      %s88 = sadd.s32 %s87, 1
      %s89 = scalar_select %p86, %s87, %s88
      %p92 = pneg %p86
      %p93 = scmp.eq.s32.totalorder %s14, 1
      %p94 = por %p92, %p93
      %p95 = scmp.ne.s32.totalorder %s87, %s90
      %p96 = scmp.eq.s32.totalorder %s14, 0
      %p97 = por %p95, %p96
      %p98 = scmp.ne.s32.totalorder %s87, %s90
      %p99 = scmp.eq.s32.totalorder %s19, 1
      %p100 = por %p98, %p99
      %p101 = scmp.ne.s32.totalorder %s90, %s91
      %p102 = scmp.eq.s32.totalorder %s19, 0
      %p103 = por %p101, %p102
      %p104 = scmp.ne.s32.totalorder %s90, %s91
      %p105 = scmp.eq.s32.totalorder %s20, 1
      %p106 = por %p104, %p105
      %p108 = scmp.ne.s32.totalorder %s91, %s107
      %p109 = scmp.eq.s32.totalorder %s20, 0
      %p110 = por %p108, %p109
      %s111 = ssub.s32 %s21, %s33
      %s112 = ssub.s32 %s22, %s29
      %s113 = sor.u32 %s111, %s112
      %p114 = scmp.eq.s32.totalorder %s113, 0
      %s116 = sadd.s32 %s115, 1
      %s117 = scalar_select %p114, %s115, %s116
      %p120 = pneg %p114
      %p121 = scmp.eq.s32.totalorder %s14, 1
      %p122 = por %p120, %p121
      %p123 = scmp.ne.s32.totalorder %s115, %s118
      %p124 = scmp.eq.s32.totalorder %s14, 0
      %p125 = por %p123, %p124
      %p126 = scmp.ne.s32.totalorder %s115, %s118
      %p127 = scmp.eq.s32.totalorder %s19, 1
      %p128 = por %p126, %p127
      %p129 = scmp.ne.s32.totalorder %s118, %s119
      %p130 = scmp.eq.s32.totalorder %s19, 0
      %p131 = por %p129, %p130
      %p132 = scmp.ne.s32.totalorder %s118, %s119
      %p133 = scmp.eq.s32.totalorder %s20, 1
      %p134 = por %p132, %p133
      %p136 = scmp.ne.s32.totalorder %s119, %s135
      %p137 = scmp.eq.s32.totalorder %s20, 0
      %p138 = por %p136, %p137
      %s139 = ssub.s32 %s21, %s33
      %s140 = ssub.s32 %s22, %s29
      %s141 = sor.u32 %s139, %s140
      %p142 = scmp.eq.s32.totalorder %s141, 0
      %s144 = sadd.s32 %s143, 1
      %s145 = scalar_select %p142, %s143, %s144
      %p148 = pneg %p142
      %p149 = scmp.eq.s32.totalorder %s14, 1
      %p150 = por %p148, %p149
      %p151 = scmp.ne.s32.totalorder %s143, %s146
      %p152 = scmp.eq.s32.totalorder %s14, 0
      %p153 = por %p151, %p152
      %p154 = scmp.ne.s32.totalorder %s143, %s146
      %p155 = scmp.eq.s32.totalorder %s19, 1
      %p156 = por %p154, %p155
      %p157 = scmp.ne.s32.totalorder %s146, %s147
      %p158 = scmp.eq.s32.totalorder %s19, 0
      %p159 = por %p157, %p158
      %p160 = scmp.ne.s32.totalorder %s146, %s147
      %p161 = scmp.eq.s32.totalorder %s20, 1
      %p162 = por %p160, %p161
      %p164 = scmp.ne.s32.totalorder %s147, %s163
      %p165 = scmp.eq.s32.totalorder %s20, 0
      %p166 = por %p164, %p165
      %p167 = scmp.le.s32.totalorder 1, %s14
      %p168 = scmp.lt.s32.totalorder %s14, 3
      %p169 = pnand %p167, %p168
      %p170 = pneg %p169
      // Predicated region
      $region9: #{tpu_custom_call.1} parent=5 // pred_check
        _
      $region10: #{tpu_custom_call.1} parent=5 // pred_check_branch
        %172 = sbr.rel (%p169) target = $region12
      $region11: #{tpu_custom_call.1} parent=5 // pred_region
        %s173 = ssub.s32 %s14, 1
        // Predicated region
        $region13: #{tpu_custom_call.1} parent=11 // pred_check
          %p174 = pneg %p75
        $region14: #{tpu_custom_call.1} parent=11 // pred_check_branch
          %176 = sbr.rel (%p174) target = $region16
        $region15: #{tpu_custom_call.1} parent=11 // pred_region
          _
        $region16: #{tpu_custom_call.1} parent=11 // pred_fallthru
          _
      $region12: #{tpu_custom_call.1} parent=5 // pred_fallthru
        _
      %p177 = scmp.lt.s32.totalorder %s14, 2
      // Predicated region
      $region17: #{tpu_custom_call.1} parent=5 // pred_check
        %p178 = pneg %p177
      $region18: #{tpu_custom_call.1} parent=5 // pred_check_branch
        %180 = sbr.rel (%p178) target = $region20
      $region19: #{tpu_custom_call.1} parent=5 // pred_region
        // Predicated region
        $region21: #{tpu_custom_call.1} parent=19 // pred_check
          %p181 = pneg %p48
        $region22: #{tpu_custom_call.1} parent=19 // pred_check_branch
          %183 = sbr.rel (%p181) target = $region24
        $region23: #{tpu_custom_call.1} parent=19 // pred_region
          %p184 = scmp.lt.s32.totalorder %s21, 1
          %s185 = scalar_select %p184, %s21, 1
          %p186 = scmp.lt.s32.totalorder %s22, 0
          %s187 = scalar_select %p186, %s22, 0
          %s188 = smul.addr %s187, 2
          %s189 = smul.addr %s185, 2
          %s190 = sadd.s32 %s188, %s189
          %s191 = smul.addr %s190, 2
          %s192 = scalar_lea.vmem %s0, %s191
        $region24: #{tpu_custom_call.1} parent=19 // pred_fallthru
          _
      $region20: #{tpu_custom_call.1} parent=5 // pred_fallthru
        _
      %p193 = scmp.le.s32.totalorder 1, %s14
      %p194 = scmp.lt.s32.totalorder %s14, 3
      %p195 = pnand %p193, %p194
      %p196 = pneg %p195
      // Predicated region
      $region25: #{tpu_custom_call.1} parent=5 // pred_check
        _
      $region26: #{tpu_custom_call.1} parent=5 // pred_check_branch
        %198 = sbr.rel (%p195) target = $region28
      $region27: #{tpu_custom_call.1} parent=5 // pred_region
        %s199 = ssub.s32 %s14, 1
        %p200 = scmp.lt.s32.totalorder %s23, 1
        %s201 = scalar_select %p200, %s23, 1
        %p202 = scmp.lt.s32.totalorder %s24, 0
        %s203 = scalar_select %p202, %s24, 0
        %s204 = smul.addr %s203, 2
        %s205 = smul.addr %s201, 2
        %s206 = sadd.s32 %s204, %s205
        %s207 = smul.addr %s206, 2
        %s208 = scalar_lea.vmem %s0, %s207
        %p209 = pneg %p54
        %p210 = pneg %p51
        %p211 = pneg %p75
        %p212 = pneg %p72
        %p213 = pneg %p103
        %p214 = pneg %p100
        %s215 = sand.u32 %s90, 1
        %s216 = scalar_lea.sflag [#allocation3], %s215
        %s217 = sand.u32 %s90, 1
        %s218 = smul.addr %s217, 4
        %s219 = scalar_lea.vmem [#allocation2], %s218
        %p220 = pneg %p131
        %p221 = pneg %p128
        %p222 = scmp.lt.s32.totalorder %s23, 1
        %s223 = scalar_select %p222, %s23, 1
        %p224 = scmp.lt.s32.totalorder %s24, 0
        %s225 = scalar_select %p224, %s24, 0
        %s226 = sadd.s32 %s225, %s223
        %s227 = smul.addr %s226, 8
        %s228 = scalar_lea.vmem %s3, %s227
        %p229 = pneg %p159
        %p230 = pneg %p156
        %p231 = scmp.lt.s32.totalorder %s23, 1
        %s232 = scalar_select %p231, %s23, 1
        %p233 = scmp.lt.s32.totalorder %s24, 0
        %s234 = scalar_select %p233, %s24, 0
        %s235 = sadd.s32 %s234, %s232
        %s236 = smul.addr %s235, 8
        %s237 = scalar_lea.vmem %s4, %s236
        %p238 = scmp.lt.s32.totalorder %s23, 1
        %s239 = scalar_select %p238, %s23, 1
        %p240 = scmp.lt.s32.totalorder %s24, 0
        %s241 = scalar_select %p240, %s24, 0
        %s242 = smul.addr %s241, 2
        %s243 = smul.addr %s239, 2
        %s244 = sadd.s32 %s242, %s243
        %s245 = smul.addr %s244, 2
        %s246 = scalar_lea.vmem %s0, %s245
        %p247 = scmp.lt.s32.totalorder %s23, 1
        %s248 = scalar_select %p247, %s23, 1
        %p249 = scmp.lt.s32.totalorder %s24, 0
        %s250 = scalar_select %p249, %s24, 0
        %s251 = sadd.s32 %s250, %s248
        %s252 = smul.addr %s251, 8
        %s253 = scalar_lea.vmem %s3, %s252
        %p254 = scmp.lt.s32.totalorder %s23, 1
        %s255 = scalar_select %p254, %s23, 1
        %p256 = scmp.lt.s32.totalorder %s24, 0
        %s257 = scalar_select %p256, %s24, 0
        %s258 = sadd.s32 %s257, %s255
        %s259 = smul.addr %s258, 8
        %s260 = scalar_lea.vmem %s4, %s259
        %v261 = vld [vmem:[%s1] sm:$0xff]
        %v262 = vld [vmem:[%s1 + $0x8] sm:$0xff]
        %v263 = vld [vmem:[%s1 + $0x10] sm:$0xff]
        %v264 = vld [vmem:[%s246] sm:$0x3]
        %v265 = vunpack.c.l.bf16 %v264
        %267 = vset.pattern.permute.xlu0 0
        %268 = vperm.xlu0 %267, %v261
        %v269 = vpop.permute.xlu0 %268
        %v271 = vlaneseq
        %v272 = vshrl.u32 %v271, 7
        %v273 = vsub.s32 0, %v272
        %v274 = vrot.slane %v265, %v273
        %v275 = vmul.f32 %v269, %v274
        %v276 = vadd.f32 %v275, 0.0
        %277 = vset.pattern.permute.xlu0 1
        %278 = vperm.xlu0 %277, %v261
        %v279 = vpop.permute.xlu0 %278
        %v281 = vlaneseq
        %v282 = vshrl.u32 %v281, 7
        %v283 = vsub.s32 1, %v282
        %v284 = vrot.slane %v265, %v283
        %v285 = vmul.f32 %v279, %v284
        %v286 = vadd.f32 %v276, %v285
        %287 = vset.pattern.permute.xlu0 2
        %288 = vperm.xlu0 %287, %v261
        %v289 = vpop.permute.xlu0 %288
        %v291 = vlaneseq
        %v292 = vshrl.u32 %v291, 7
        %v293 = vsub.s32 2, %v292
        %v294 = vrot.slane %v265, %v293
        %v295 = vmul.f32 %v289, %v294
        %v296 = vadd.f32 %v286, %v295
        %297 = vset.pattern.permute.xlu0 3
        %298 = vperm.xlu0 %297, %v261
        %v299 = vpop.permute.xlu0 %298
        %v301 = vlaneseq
        %v302 = vshrl.u32 %v301, 7
        %v303 = vsub.s32 3, %v302
        %v304 = vrot.slane %v265, %v303
        %v305 = vmul.f32 %v299, %v304
        %v306 = vadd.f32 %v296, %v305
        %v307 = vld [vmem:[%s246] sm:$0xf]
        %v308 = vunpack.c.l.bf16 %v307
        %310 = vset.pattern.permute.xlu0 0
        %311 = vperm.xlu0 %310, %v262
        %v312 = vpop.permute.xlu0 %311
        %v315 = vlaneseq
        %v316 = vshrl.u32 %v315, 7
        %v317 = vsub.s32 0, %v316
        %v318 = vrot.slane %v308, %v317
        %v319 = vlaneseq
        %v320 = vshrl.u32 %v319, 7
        %v321 = vsub.s32 4, %v320
        %v322 = vrot.slane %v308, %v321
        %v325 = vlaneseq
        %v326 = vshrl.u32 %v325, 7
        %v327 = vsub.s32 0, %v326
        %v328 = vrot.slane %v318, %v327
        %v329 = vlaneseq
        %v330 = vshrl.u32 %v329, 7
        %v331 = vsub.s32 0, %v330
        %v332 = vrot.slane %v322, %v331
        %v333 = vmul.f32 %v312, %v328
        %v334 = vmul.f32 %v312, %v332
        %337 = vrot.lane.b32.xlu0 %v333, 127
        %v338 = vpop.permute.xlu0 %337
        %339 = vrot.lane.b32.xlu0 %v334, 127
        %v340 = vpop.permute.xlu0 %339
        %vm341 = vcmask 1039360
        %v342 = vsel %vm341, %v338, %v340
        %v344 = vadd.f32 %v306, %v342
        %345 = vset.pattern.permute.xlu0 1
        %346 = vperm.xlu0 %345, %v262
        %v347 = vpop.permute.xlu0 %346
        %v349 = vlaneseq
        %v350 = vshrl.u32 %v349, 7
        %v351 = vsub.s32 1, %v350
        %v352 = vrot.slane %v308, %v351
        %v353 = vlaneseq
        %v354 = vshrl.u32 %v353, 7
        %v355 = vsub.s32 5, %v354
        %v356 = vrot.slane %v308, %v355
        %v359 = vlaneseq
        %v360 = vshrl.u32 %v359, 7
        %v361 = vsub.s32 1, %v360
        %v362 = vrot.slane %v352, %v361
        %v363 = vlaneseq
        %v364 = vshrl.u32 %v363, 7
        %v365 = vsub.s32 1, %v364
        %v366 = vrot.slane %v356, %v365
        %v367 = vmul.f32 %v347, %v362
        %v368 = vmul.f32 %v347, %v366
        %371 = vrot.lane.b32.xlu0 %v367, 127
        %v372 = vpop.permute.xlu0 %371
        %373 = vrot.lane.b32.xlu0 %v368, 127
        %v374 = vpop.permute.xlu0 %373
        %v375 = vsel %vm341, %v372, %v374
        %v377 = vadd.f32 %v344, %v375
        %378 = vset.pattern.permute.xlu0 2
        %379 = vperm.xlu0 %378, %v262
        %v380 = vpop.permute.xlu0 %379
        %v382 = vlaneseq
        %v383 = vshrl.u32 %v382, 7
        %v384 = vsub.s32 2, %v383
        %v385 = vrot.slane %v308, %v384
        %v386 = vlaneseq
        %v387 = vshrl.u32 %v386, 7
        %v388 = vsub.s32 6, %v387
        %v389 = vrot.slane %v308, %v388
        %v392 = vlaneseq
        %v393 = vshrl.u32 %v392, 7
        %v394 = vsub.s32 2, %v393
        %v395 = vrot.slane %v385, %v394
        %v396 = vlaneseq
        %v397 = vshrl.u32 %v396, 7
        %v398 = vsub.s32 2, %v397
        %v399 = vrot.slane %v389, %v398
        %v400 = vmul.f32 %v380, %v395
        %v401 = vmul.f32 %v380, %v399
        %404 = vrot.lane.b32.xlu0 %v400, 127
        %v405 = vpop.permute.xlu0 %404
        %406 = vrot.lane.b32.xlu0 %v401, 127
        %v407 = vpop.permute.xlu0 %406
        %v408 = vsel %vm341, %v405, %v407
        %v410 = vadd.f32 %v377, %v408
        %411 = vset.pattern.permute.xlu0 3
        %412 = vperm.xlu0 %411, %v262
        %v413 = vpop.permute.xlu0 %412
        %v415 = vlaneseq
        %v416 = vshrl.u32 %v415, 7
        %v417 = vsub.s32 3, %v416
        %v418 = vrot.slane %v308, %v417
        %v419 = vlaneseq
        %v420 = vshrl.u32 %v419, 7
        %v421 = vsub.s32 7, %v420
        %v422 = vrot.slane %v308, %v421
        %v425 = vlaneseq
        %v426 = vshrl.u32 %v425, 7
        %v427 = vsub.s32 3, %v426
        %v428 = vrot.slane %v418, %v427
        %v429 = vlaneseq
        %v430 = vshrl.u32 %v429, 7
        %v431 = vsub.s32 3, %v430
        %v432 = vrot.slane %v422, %v431
        %v433 = vmul.f32 %v413, %v428
        %v434 = vmul.f32 %v413, %v432
        %437 = vrot.lane.b32.xlu0 %v433, 127
        %v438 = vpop.permute.xlu0 %437
        %439 = vrot.lane.b32.xlu0 %v434, 127
        %v440 = vpop.permute.xlu0 %439
        %v441 = vsel %vm341, %v438, %v440
        %v443 = vadd.f32 %v410, %v441
        %445 = vset.pattern.permute.xlu0 0
        %446 = vperm.xlu0 %445, %v263
        %v447 = vpop.permute.xlu0 %446
        %v449 = vmul.f32 %v447, %v328
        %v450 = vmul.f32 %v447, %v332
        %453 = vrot.lane.b32.xlu0 %v449, 126
        %v454 = vpop.permute.xlu0 %453
        %455 = vrot.lane.b32.xlu0 %v450, 126
        %v456 = vpop.permute.xlu0 %455
        %vm457 = vcmask 1031168
        %v458 = vsel %vm457, %v454, %v456
        %v460 = vadd.f32 %v443, %v458
        %461 = vset.pattern.permute.xlu0 1
        %462 = vperm.xlu0 %461, %v263
        %v463 = vpop.permute.xlu0 %462
        %v465 = vmul.f32 %v463, %v362
        %v466 = vmul.f32 %v463, %v366
        %469 = vrot.lane.b32.xlu0 %v465, 126
        %v470 = vpop.permute.xlu0 %469
        %471 = vrot.lane.b32.xlu0 %v466, 126
        %v472 = vpop.permute.xlu0 %471
        %v473 = vsel %vm457, %v470, %v472
        %v475 = vadd.f32 %v460, %v473
        %476 = vset.pattern.permute.xlu0 2
        %477 = vperm.xlu0 %476, %v263
        %v478 = vpop.permute.xlu0 %477
        %v480 = vmul.f32 %v478, %v395
        %v481 = vmul.f32 %v478, %v399
        %484 = vrot.lane.b32.xlu0 %v480, 126
        %v485 = vpop.permute.xlu0 %484
        %486 = vrot.lane.b32.xlu0 %v481, 126
        %v487 = vpop.permute.xlu0 %486
        %v488 = vsel %vm457, %v485, %v487
        %v490 = vadd.f32 %v475, %v488
        %491 = vset.pattern.permute.xlu0 3
        %492 = vperm.xlu0 %491, %v263
        %v493 = vpop.permute.xlu0 %492
        %v495 = vmul.f32 %v493, %v428
        %v496 = vmul.f32 %v493, %v432
        %499 = vrot.lane.b32.xlu0 %v495, 126
        %v500 = vpop.permute.xlu0 %499
        %501 = vrot.lane.b32.xlu0 %v496, 126
        %v502 = vpop.permute.xlu0 %501
        %v503 = vsel %vm457, %v500, %v502
        %v505 = vadd.f32 %v490, %v503
        %v506 = vmax.f32 %v505, 0.0
        %v507 = vpack.c.bf16 %v506, %v506
        %508 = vst [vmem:[%s219] sm:$0xf] %v507
        %p509 = scmp.ne.s32.totalorder %s24, 0
        // Predicated region
        $region29: #{tpu_custom_call.1} parent=27 // pred_check
          %p510 = pneg %p509
        $region30: #{tpu_custom_call.1} parent=27 // pred_check_branch
          %512 = sbr.rel (%p510) target = $region32
        $region31: #{tpu_custom_call.1} parent=27 // pred_region
          %513 = vadd.xlane.f32.xlu0 %v506
          %v514 = vpop.xlane.xlu0 %513
          %vm515 = vcmask 7168
          %516 = vst.msk [vmem:[%s253] sm:$0xff] %vm515, %v514
          %v517 = vmul.f32 %v506, %v506
          %518 = vadd.xlane.f32.xlu0 %v517
          %v519 = vpop.xlane.xlu0 %518
          %520 = vst.msk [vmem:[%s260] sm:$0xff] %vm515, %v519
        $region32: #{tpu_custom_call.1} parent=27 // pred_fallthru
          _
        %p521 = scmp.eq.s32.totalorder %s24, 0
        // Predicated region
        $region33: #{tpu_custom_call.1} parent=27 // pred_check
          %p522 = pneg %p521
        $region34: #{tpu_custom_call.1} parent=27 // pred_check_branch
          %524 = sbr.rel (%p522) target = $region36
        $region35: #{tpu_custom_call.1} parent=27 // pred_region
          %v525 = vlaneseq
          %v526 = vand.u32 %v525, 127
          %vm527 = vcmp.lt.s32.totalorder %v526, 16
          %v528 = vsel %vm527, %v506, 0.0
          %529 = vadd.xlane.f32.xlu0 %v528
          %v530 = vpop.xlane.xlu0 %529
          %vm531 = vcmask 7168
          %532 = vst.msk [vmem:[%s253] sm:$0xff] %vm531, %v530
          %v533 = vmul.f32 %v528, %v528
          %534 = vadd.xlane.f32.xlu0 %v533
          %v535 = vpop.xlane.xlu0 %534
          %536 = vst.msk [vmem:[%s260] sm:$0xff] %vm531, %v535
        $region36: #{tpu_custom_call.1} parent=27 // pred_fallthru
          _
        %s537 = sand.u32 %s90, 1
        %s538 = scalar_lea.sflag [#allocation3], %s537
        %s539 = sand.u32 %s90, 1
        %s540 = smul.addr %s539, 4
        %s541 = scalar_lea.vmem [#allocation2], %s540
        %p542 = scmp.lt.s32.totalorder %s23, 1
        %s543 = scalar_select %p542, %s23, 1
        %p544 = scmp.lt.s32.totalorder %s24, 0
        %s545 = scalar_select %p544, %s24, 0
        %s546 = sadd.s32 %s545, %s543
        %s547 = smul.addr %s546, 8
        %s548 = scalar_lea.vmem %s3, %s547
        %p549 = scmp.lt.s32.totalorder %s23, 1
        %s550 = scalar_select %p549, %s23, 1
        %p551 = scmp.lt.s32.totalorder %s24, 0
        %s552 = scalar_select %p551, %s24, 0
        %s553 = sadd.s32 %s552, %s550
        %s554 = smul.addr %s553, 8
        %s555 = scalar_lea.vmem %s4, %s554
        // Predicated region
        $region37: #{tpu_custom_call.1} parent=27 // pred_check
          %p556 = pneg %p100
        $region38: #{tpu_custom_call.1} parent=27 // pred_check_branch
          %558 = sbr.rel (%p556) target = $region40
        $region39: #{tpu_custom_call.1} parent=27 // pred_region
          %s560 = ssub.s32 64, 64
          %561 = vsyncadd %s538, %s560
          %s562 = sadd.s32 %s24, %s23
          %s563 = smul.addr %s562, 64
          %s564 = scalar_lea.hbm %s2, %s563
          %s566 = sshll.u32 %s541, 4
          %s567 = int_to_ptr.vmem [resolvable:$true] %s566
          %569 = dma.vmem_to_hbm [thread:$0]  %s567, 64, %s564, %s538
        $region40: #{tpu_custom_call.1} parent=27 // pred_fallthru
          _
        // Predicated region
        $region41: #{tpu_custom_call.1} parent=27 // pred_check
          %p570 = pneg %p128
        $region42: #{tpu_custom_call.1} parent=27 // pred_check_branch
          %572 = sbr.rel (%p570) target = $region44
        $region43: #{tpu_custom_call.1} parent=27 // pred_region
          _
        $region44: #{tpu_custom_call.1} parent=27 // pred_fallthru
          _
        // Predicated region
        $region45: #{tpu_custom_call.1} parent=27 // pred_check
          %p573 = pneg %p156
        $region46: #{tpu_custom_call.1} parent=27 // pred_check_branch
          %575 = sbr.rel (%p573) target = $region48
        $region47: #{tpu_custom_call.1} parent=27 // pred_region
          _
        $region48: #{tpu_custom_call.1} parent=27 // pred_fallthru
          _
      $region28: #{tpu_custom_call.1} parent=5 // pred_fallthru
        _
      %p576 = scmp.le.s32.totalorder 2, %s14
      // Predicated region
      $region49: #{tpu_custom_call.1} parent=5 // pred_check
        %p577 = pneg %p576
      $region50: #{tpu_custom_call.1} parent=5 // pred_check_branch
        %579 = sbr.rel (%p577) target = $region52
      $region51: #{tpu_custom_call.1} parent=5 // pred_region
        %s580 = ssub.s32 %s14, 2
        // Predicated region
        $region53: #{tpu_custom_call.1} parent=51 // pred_check
          %p581 = pneg %p106
        $region54: #{tpu_custom_call.1} parent=51 // pred_check_branch
          %583 = sbr.rel (%p581) target = $region56
        $region55: #{tpu_custom_call.1} parent=51 // pred_region
          %s584 = sand.u32 %s91, 1
          %s585 = scalar_lea.sflag [#allocation3], %s584
          %s586 = sand.u32 %s91, 1
          %s587 = smul.addr %s586, 4
          %s588 = scalar_lea.vmem [#allocation2], %s587
          %589 = dma.done %s585, 64
        $region56: #{tpu_custom_call.1} parent=51 // pred_fallthru
          _
        // Predicated region
        $region57: #{tpu_custom_call.1} parent=51 // pred_check
          %p590 = pneg %p134
        $region58: #{tpu_custom_call.1} parent=51 // pred_check_branch
          %592 = sbr.rel (%p590) target = $region60
        $region59: #{tpu_custom_call.1} parent=51 // pred_region
          %p593 = scmp.lt.s32.totalorder %s25, 1
          %s594 = scalar_select %p593, %s25, 1
          %p595 = scmp.lt.s32.totalorder %s26, 0
          %s596 = scalar_select %p595, %s26, 0
          %s597 = sadd.s32 %s596, %s594
          %s598 = smul.addr %s597, 8
          %s599 = scalar_lea.vmem %s3, %s598
        $region60: #{tpu_custom_call.1} parent=51 // pred_fallthru
          _
        // Predicated region
        $region61: #{tpu_custom_call.1} parent=51 // pred_check
          %p600 = pneg %p162
        $region62: #{tpu_custom_call.1} parent=51 // pred_check_branch
          %602 = sbr.rel (%p600) target = $region64
        $region63: #{tpu_custom_call.1} parent=51 // pred_region
          %p603 = scmp.lt.s32.totalorder %s25, 1
          %s604 = scalar_select %p603, %s25, 1
          %p605 = scmp.lt.s32.totalorder %s26, 0
          %s606 = scalar_select %p605, %s26, 0
          %s607 = sadd.s32 %s606, %s604
          %s608 = smul.addr %s607, 8
          %s609 = scalar_lea.vmem %s4, %s608
        $region64: #{tpu_custom_call.1} parent=51 // pred_fallthru
          _
      $region52: #{tpu_custom_call.1} parent=5 // pred_fallthru
        _
    $region6: #{tpu_custom_call.1} parent=1 // loop_footer
      %s18 = sadd.s32 1, %s14
    $region7: #{tpu_custom_call.1} parent=1 // loop_footer_branch
      %13 = sbr.rel target = $region3
    $region8: #{tpu_custom_call.1} parent=1 // loop_exit
      _
    %610 = vsyncpa [#allocation3], 1
    %s611 = scalar_lea.sflag [#allocation3], 1
    %612 = vsyncpa %s611, 1

</llo_original>
